<compile_context>
chip_gen: v7x
topology: tpu7x:2x2x1
jax: 0.10.0
libtpu: 0.0.40
codegen_flags: <defaults>
</compile_context>

<pallas_src>
import numpy as np
import jax
import jax.numpy as jnp
from jax.experimental import pallas as pl
from jax.experimental.pallas import tpu as pltpu

# ---- module config (matches the file-level constants of the PyTorch source) ----
SR = 32000
N_FFT = 512
HOP = 128
N_FILTERS = 40
F_MIN = 1000.0
F_MAX = 8000.0
INIT_BREAKPOINT = 4000.0
INIT_TRANSITION_WIDTH = 100.0

N_FREQ = N_FFT // 2 + 1          # 257
LANE = 128

# ---- frequency trim (exact), derived at trace time from the constants ----
_F_MIN_BIN = F_MIN / (SR / 2.0) * (N_FFT / 2.0)          # 16.0
_F_MAX_BIN = F_MAX / (SR / 2.0) * (N_FFT / 2.0)          # 128.0
K_LO = max(int(np.floor(_F_MIN_BIN)), 0)                 # 16
K_HI = min(int(np.ceil(_F_MAX_BIN)), N_FREQ - 1)         # 128
N_TRIM = K_HI - K_LO + 1                                 # 113
N_TRIM_PAD = ((N_TRIM + LANE - 1) // LANE) * LANE        # 128 per re/im half
N_FILTERS_PAD = ((N_FILTERS + LANE - 1) // LANE) * LANE  # 128


# ----------------------------- glue (plain JAX) -----------------------------
def _hann_window(n_fft):
    # torch.hann_window default is periodic=True
    n = jnp.arange(n_fft, dtype=jnp.float32)
    return 0.5 - 0.5 * jnp.cos(2.0 * jnp.pi * n / n_fft)


def _windowed_dft_matrix():
    """(n_fft, 2*N_TRIM_PAD) f32: [hann*cos | hann*(-sin)] for bins K_LO..K_HI,
    each half zero-padded to a multiple of 128 lanes (exact padding)."""
    n = jnp.arange(N_FFT, dtype=jnp.float32)[:, None]
    k = jnp.arange(K_LO, K_HI + 1, dtype=jnp.float32)[None, :]
    ang = 2.0 * jnp.pi * n * k / float(N_FFT)
    win = _hann_window(N_FFT)[:, None]
    wcos = win * jnp.cos(ang)            # (n_fft, N_TRIM)
    wsin = win * (-jnp.sin(ang))         # (n_fft, N_TRIM)
    pad = ((0, 0), (0, N_TRIM_PAD - N_TRIM))
    return jnp.concatenate([jnp.pad(wcos, pad), jnp.pad(wsin, pad)], axis=1)


def _filter_bank(breakpoint, transition_width):
    # combined_log_linear triangular filter bank, (n_filters, n_freq) over ALL bins
    x = jnp.linspace(0.0, 1.0, N_FILTERS, dtype=jnp.float32)
    eps = 0.01
    bp = jnp.clip(breakpoint, F_MIN + eps, F_MAX - eps)
    log_part = F_MIN * (F_MAX / F_MIN) ** x
    lin_part = F_MIN + x * (F_MAX - F_MIN)
    nbp = (bp - F_MIN) / (F_MAX - F_MIN)
    S = jax.nn.sigmoid((x - nbp) * transition_width)
    centers = jnp.clip((1.0 - S) * log_part + S * lin_part, F_MIN, F_MAX)

    center_bins = centers / (SR / 2.0) * (N_FFT / 2.0)
    fmin_bin = jnp.asarray([_F_MIN_BIN], jnp.float32)
    fmax_bin = jnp.asarray([_F_MAX_BIN], jnp.float32)
    left = jnp.concatenate([fmin_bin, center_bins[:-1]])
    right = jnp.concatenate([center_bins[1:], fmax_bin])

    fft_ax = jnp.arange(N_FREQ, dtype=jnp.float32)[None, :]
    f_m = center_bins[:, None]
    f_l = left[:, None]
    f_r = right[:, None]
    e = 1e-8
    ramp_up = (fft_ax - f_l) / (f_m - f_l + e)
    ramp_down = (f_r - fft_ax) / (f_r - f_m + e)
    return jnp.maximum(0.0, jnp.minimum(ramp_up, ramp_down))


def _frame_bf16(waveform):
    # torch.stft(center=True, pad_mode='reflect') framing; cast to bf16 BEFORE
    # the gather so the frame slab is half-size and the kernel never reads f32.
    pad = N_FFT // 2
    xp = jnp.pad(waveform, ((0, 0), (pad, pad)), mode="reflect").astype(jnp.bfloat16)
    n_frames = 1 + (xp.shape[1] - N_FFT) // HOP
    idx = jnp.arange(n_frames)[:, None] * HOP + jnp.arange(N_FFT)[None, :]
    frames = xp[:, idx]                   # (B, n_frames, n_fft) bf16
    return frames, n_frames


def _choose_tm(M):
    """Large M-tile (up to 2048) with >=4 tiles when the input allows it, so
    the single 'parallel' grid axis splits evenly across v7x's 2 TensorCores
    and the ~0.35us/step overhead is amortized."""
    for tm in (2048, 1024, 512, 256, 128):
        if M >= 4 * tm:
            return tm
    if M >= 2 * 128:
        return 128
    # tiny inputs: single tile, rounded up to a multiple of 16 (bf16 sublanes)
    return max(16, ((M + 15) // 16) * 16)


# ------------------------------- Pallas kernel -------------------------------
def spec_kernel(frames_ref, wdft_ref, fbt_ref, out_ref):
    # Single MXU matmul produces [re | im] for the trimmed+padded bins.
    reim = jnp.dot(frames_ref[...], wdft_ref[...],
                   preferred_element_type=jnp.float32)       # (TM, 2*N_TRIM_PAD)
    re = reim[:, :N_TRIM_PAD]                                 # lane-aligned slice
    im = reim[:, N_TRIM_PAD:]                                 # lane-aligned slice
    # epsilon keeps d(sqrt)/d(re,im) finite on the exact-zero padded lanes/rows
    mag = jnp.sqrt(re * re + im * im + 1e-12)                 # (TM, N_TRIM_PAD) f32
    out_ref[...] = jnp.dot(mag.astype(fbt_ref.dtype), fbt_ref[...],
                           preferred_element_type=jnp.float32)  # (TM, N_FILTERS_PAD)


def differentiable_spectrogram(waveform,
                               breakpoint=INIT_BREAKPOINT,
                               transition_width=INIT_TRANSITION_WIDTH):
    waveform = jnp.asarray(waveform, jnp.float32)
    if waveform.ndim == 1:
        waveform = waveform[None, :]
    B, _ = waveform.shape

    frames, n_frames = _frame_bf16(waveform)             # (B, n_frames, n_fft) bf16
    M = B * n_frames
    TM = _choose_tm(M)
    M_pad = ((M + TM - 1) // TM) * TM

    frames2d = frames.reshape(M, N_FFT)
    frames2d = jnp.pad(frames2d, ((0, M_pad - M), (0, 0)))   # bf16, exact zero pad

    wdft = _windowed_dft_matrix().astype(jnp.bfloat16)       # (n_fft, 2*N_TRIM_PAD)

    fb = _filter_bank(jnp.asarray(breakpoint, jnp.float32),
                      jnp.asarray(transition_width, jnp.float32))  # (40, 257)
    fb_trim = fb[:, K_LO:K_HI + 1]                           # (40, N_TRIM), exact
    fbt = jnp.zeros((N_TRIM_PAD, N_FILTERS_PAD), jnp.float32)
    fbt = fbt.at[:N_TRIM, :N_FILTERS].set(fb_trim.T).astype(jnp.bfloat16)

    out = pl.pallas_call(
        spec_kernel,
        out_shape=jax.ShapeDtypeStruct((M_pad, N_FILTERS_PAD), jnp.float32),
        grid_spec=pltpu.PrefetchScalarGridSpec(
            num_scalar_prefetch=0,
            grid=(M_pad // TM,),
            in_specs=[
                pl.BlockSpec((TM, N_FFT), lambda i: (i, 0)),
                # constants: revisited block -> Pallas skips re-DMA; default
                # double-buffering only costs ~0.3 MiB post-trim, left as-is.
                pl.BlockSpec((N_FFT, 2 * N_TRIM_PAD), lambda i: (0, 0)),
                pl.BlockSpec((N_TRIM_PAD, N_FILTERS_PAD), lambda i: (0, 0)),
            ],
            out_specs=pl.BlockSpec((TM, N_FILTERS_PAD), lambda i: (i, 0)),
        ),
        compiler_params=pltpu.CompilerParams(
            dimension_semantics=("parallel",),
            # cap (not a reservation): lets TM=2048 fit on v5e's 16 MiB default
            # scoped limit; well under v7x's 64 MiB physical VMEM.
            vmem_limit_bytes=32 * 1024 * 1024,
        ),
    )(frames2d, wdft, fbt)

    out = out[:M, :N_FILTERS].reshape(B, n_frames, N_FILTERS)
    # match torch output layout: (B, n_filters, n_frames)
    return jnp.transpose(out, (0, 2, 1))


# ------------------------------ pure-JAX reference ---------------------------
def _reference(waveform, breakpoint=INIT_BREAKPOINT,
               transition_width=INIT_TRANSITION_WIDTH):
    # full-frequency, f32 everywhere (validates both the bf16 path and the
    # exactness of the frequency trim).
    waveform = jnp.asarray(waveform, jnp.float32)
    if waveform.ndim == 1:
        waveform = waveform[None, :]
    pad = N_FFT // 2
    xp = jnp.pad(waveform, ((0, 0), (pad, pad)), mode="reflect")
    n_frames = 1 + (xp.shape[1] - N_FFT) // HOP
    idx = jnp.arange(n_frames)[:, None] * HOP + jnp.arange(N_FFT)[None, :]
    frames = xp[:, idx]
    window = _hann_window(N_FFT)
    fw = frames * window[None, None, :]
    n = jnp.arange(N_FFT, dtype=jnp.float32)[:, None]
    f = jnp.arange(N_FREQ, dtype=jnp.float32)[None, :]
    ang = 2.0 * jnp.pi * n * f / float(N_FFT)
    re = jnp.einsum("bmn,nf->bmf", fw, jnp.cos(ang))
    im = jnp.einsum("bmn,nf->bmf", fw, -jnp.sin(ang))
    mag = jnp.sqrt(re * re + im * im)
    fb = _filter_bank(jnp.asarray(breakpoint, jnp.float32),
                      jnp.asarray(transition_width, jnp.float32))
    return jnp.einsum("kf,bmf->bkm", fb, mag)


if __name__ == "__main__":
    key = jax.random.PRNGKey(0)
    # small shapes: batch=2, 2048 samples -> n_frames = 1 + 2048/128 = 17
    waveform = jax.random.normal(key, (2, 2048), dtype=jnp.float32)

    spec = jax.block_until_ready(differentiable_spectrogram(waveform))
    ref = jax.block_until_ready(_reference(waveform))
    assert spec.shape == (2, N_FILTERS, 17), spec.shape

    spec_np = np.asarray(spec, np.float32)
    ref_np = np.asarray(ref, np.float32)
    # bf16 MXU operands (frames, DFT basis, mag, filter bank) with f32
    # accumulation: worst-case per-element relative error ~1-2% (observed
    # max 1.6%); padding/frequency trim are exact.  Tolerance sized for bf16,
    # plus a tighter mean-error check to keep the test meaningful.
    np.testing.assert_allclose(spec_np, ref_np, rtol=5e-2, atol=5e-2)
    mean_err = np.abs(spec_np - ref_np).mean()
    assert mean_err < 1e-2 * max(np.abs(ref_np).mean(), 1.0), mean_err
    print("KERNEL_OK")
</pallas_src>

<mosaic_0001>
module attributes {stable_mosaic.version = 11 : i64} {
  func.func @spec_kernel(%arg0: i32, %arg1: memref<48x512xbf16, #tpu.memory_space<vmem>>, %arg2: memref<512x256xbf16, #tpu.memory_space<vmem>>, %arg3: memref<128x128xbf16, #tpu.memory_space<vmem>>, %arg4: memref<48x128xf32, #tpu.memory_space<vmem>>) attributes {dimension_semantics = [#tpu.dimension_semantics<parallel>], iteration_bounds = array<i64: 1>, scalar_prefetch = 0 : i64, scratch_operands = 0 : i64, tpu.core_type = #tpu.core_type<tc>, window_params = [{transform_indices = @transform_0, window_bounds = array<i64: 48, 512>}, {pipeline_mode = #tpu.pipeline_mode<synchronous>, transform_indices = @transform_1, window_bounds = array<i64: 512, 256>}, {pipeline_mode = #tpu.pipeline_mode<synchronous>, transform_indices = @transform_2, window_bounds = array<i64: 128, 128>}, {transform_indices = @transform_3, window_bounds = array<i64: 48, 128>}]} {
    %c0 = arith.constant 0 : index
    %c0_0 = arith.constant 0 : index
    %0 = vector.load %arg1[%c0, %c0_0] : memref<48x512xbf16, #tpu.memory_space<vmem>>, vector<48x512xbf16>
    %c0_1 = arith.constant 0 : index
    %c0_2 = arith.constant 0 : index
    %1 = vector.load %arg2[%c0_1, %c0_2] : memref<512x256xbf16, #tpu.memory_space<vmem>>, vector<512x256xbf16>
    %cst = arith.constant dense<0.000000e+00> : vector<48x256xf32>
    %2 = tpu.matmul %0, %1, %cst {dimension_numbers = #tpu.dot_dimension_numbers<[1], [0], [0], [1], [0, 0, 1, 1], [], []>} : vector<48x512xbf16>, vector<512x256xbf16>, vector<48x256xf32> -> vector<48x256xf32>
    %3 = vector.extract_strided_slice %2 {offsets = [0, 0], sizes = [48, 128], strides = [1, 1]} : vector<48x256xf32> to vector<48x128xf32>
    %4 = vector.extract_strided_slice %2 {offsets = [0, 128], sizes = [48, 128], strides = [1, 1]} : vector<48x256xf32> to vector<48x128xf32>
    %5 = arith.mulf %3, %3 : vector<48x128xf32>
    %6 = arith.mulf %4, %4 : vector<48x128xf32>
    %7 = arith.addf %5, %6 : vector<48x128xf32>
    %cst_3 = arith.constant 9.99999996E-13 : f32
    %8 = vector.broadcast %cst_3 : f32 to vector<48x128xf32>
    %9 = arith.addf %7, %8 : vector<48x128xf32>
    %10 = math.sqrt %9 : vector<48x128xf32>
    %11 = arith.truncf %10 : vector<48x128xf32> to vector<48x128xbf16>
    %c0_4 = arith.constant 0 : index
    %c0_5 = arith.constant 0 : index
    %12 = vector.load %arg3[%c0_4, %c0_5] : memref<128x128xbf16, #tpu.memory_space<vmem>>, vector<128x128xbf16>
    %cst_6 = arith.constant dense<0.000000e+00> : vector<48x128xf32>
    %13 = tpu.matmul %11, %12, %cst_6 {dimension_numbers = #tpu.dot_dimension_numbers<[1], [0], [0], [1], [0, 0, 1, 1], [], []>} : vector<48x128xbf16>, vector<128x128xbf16>, vector<48x128xf32> -> vector<48x128xf32>
    %c0_7 = arith.constant 0 : index
    %c0_8 = arith.constant 0 : index
    %14 = vector.load %arg4[%c0_7, %c0_8] : memref<48x128xf32, #tpu.memory_space<vmem>>, vector<48x128xf32>
    tpu.vector_store %arg4[%c0_7, %c0_8], %13 {strides = array<i32>} : memref<48x128xf32, #tpu.memory_space<vmem>>, vector<48x128xf32>,
    return
  }
  func.func @transform_0(%arg0: i32) -> (i32, i32) {
    %c0_i32 = arith.constant 0 : i32
    %c0_i32_0 = arith.constant 0 : i32
    return %arg0, %c0_i32 : i32, i32
  }
  func.func @transform_1(%arg0: i32) -> (i32, i32) {
    %c0_i32 = arith.constant 0 : i32
    %c0_i32_0 = arith.constant 0 : i32
    %c0_i32_1 = arith.constant 0 : i32
    return %c0_i32, %c0_i32_0 : i32, i32
  }
  func.func @transform_2(%arg0: i32) -> (i32, i32) {
    %c0_i32 = arith.constant 0 : i32
    %c0_i32_0 = arith.constant 0 : i32
    %c0_i32_1 = arith.constant 0 : i32
    return %c0_i32, %c0_i32_0 : i32, i32
  }
  func.func @transform_3(%arg0: i32) -> (i32, i32) {
    %c0_i32 = arith.constant 0 : i32
    %c0_i32_0 = arith.constant 0 : i32
    return %arg0, %c0_i32 : i32, i32
  }
}

</mosaic_0001>

<llo_original>
// kernel: tpu_custom_call.1
$region0: #{tpu_custom_call.1}
  #allocation0 [shape = 'u32[]', space=smem, size = 0x4, offset = 0x4, fixed_abs, tag = 'smem constant byte address 0x4 - core index']
  #allocation1 [shape = 'u32[144,128]{1,0:T(1,128)}', space=vmem, size = 0x12000, scoped, tag = 'internal scratch']
  %s0 = inlined_call_operand.hbm [shape: bf16[48,512], index: 0, kind: input, shape index: {}]
  %s1 = inlined_call_operand.hbm [shape: bf16[512,256], index: 1, kind: input, shape index: {}]
  %s2 = inlined_call_operand.hbm [shape: bf16[128,128], index: 2, kind: input, shape index: {}]
  %s3 = inlined_call_operand.hbm [shape: f32[48,128], index: 3, kind: output, shape index: {}]
  %s4 = sld [smem:[#allocation0]]
  $region34: #{tpu_custom_call.1} parent=0
    _
  %s6 = ssub.s32 1, %s4
  %s7 = scalar_select 0, %s6, %s4
  $region1: #{tpu_custom_call.1} parent=0
    #allocation2 [shape = 'u8[49152]{0}', space=vmem, size = 0xc000, scoped, tag = 'input window, operand 0, single buffered']
    #allocation3 [shape = 's32[1]{0}', space=sflag, size = 0x4, scoped, tag = 'scoped memory for tpu_custom_call.1']
    #allocation4 [shape = 's32[1]{0}', space=sflag, size = 0x4, scoped, tag = 'scoped memory for tpu_custom_call.1']
    #allocation5 [shape = 'u8[262144]{0}', space=vmem, size = 0x40000, scoped, tag = 'input window, operand 1, single buffered']
    #allocation6 [shape = 's32[1]{0}', space=sflag, size = 0x4, scoped, tag = 'scoped memory for tpu_custom_call.1']
    #allocation7 [shape = 'u8[32768]{0}', space=vmem, size = 0x8000, scoped, tag = 'input window, operand 2, single buffered']
    #allocation8 [shape = 'u8[24576]{0}', space=vmem, size = 0x6000, scoped, tag = 'output window, operand 0, single buffered']
    %8 = vsyncpa [#allocation3], 0
    %9 = vsyncpa [#allocation6], 0
    %10 = vsyncpa [#allocation4], 0
    // Predicated region
    $region2: #{tpu_custom_call.1} parent=1 // pred_check
      _
    $region3: #{tpu_custom_call.1} parent=1 // pred_check_branch
      %12 = sbr.rel (0) target = $region5
    $region4: #{tpu_custom_call.1} parent=1 // pred_region
      %s14 = ssub.s32 1536, 1536
      %15 = vsyncadd [#allocation3], %s14
      %s16 = sshll.u32 [#allocation2], 4
      %s17 = int_to_ptr.vmem [resolvable:$true] %s16
      %22 = dma.hbm_to_vmem [thread:$0]  %s0, 1536, %s17, [#allocation3], 256, 256, 16
    $region5: #{tpu_custom_call.1} parent=1 // pred_fallthru
      _
    // Predicated region
    $region6: #{tpu_custom_call.1} parent=1 // pred_check
      _
    $region7: #{tpu_custom_call.1} parent=1 // pred_check_branch
      %24 = sbr.rel (0) target = $region9
    $region8: #{tpu_custom_call.1} parent=1 // pred_region
      %s26 = ssub.s32 8192, 8192
      %27 = vsyncadd [#allocation6], %s26
      %s28 = sshll.u32 [#allocation5], 4
      %s29 = int_to_ptr.vmem [resolvable:$true] %s28
      %34 = dma.hbm_to_vmem [thread:$0]  %s1, 8192, %s29, [#allocation6], 128, 128, 8
    $region9: #{tpu_custom_call.1} parent=1 // pred_fallthru
      _
    // Predicated region
    $region10: #{tpu_custom_call.1} parent=1 // pred_check
      _
    $region11: #{tpu_custom_call.1} parent=1 // pred_check_branch
      %36 = sbr.rel (0) target = $region13
    $region12: #{tpu_custom_call.1} parent=1 // pred_region
      %s38 = ssub.s32 1024, 1024
      %39 = vsyncadd [#allocation6], %s38
      %s40 = sshll.u32 [#allocation7], 4
      %s41 = int_to_ptr.vmem [resolvable:$true] %s40
      %46 = dma.hbm_to_vmem [thread:$0]  %s2, 1024, %s41, [#allocation6], 64, 64, 4
    $region13: #{tpu_custom_call.1} parent=1 // pred_fallthru
      _
    // Predicated region
    $region14: #{tpu_custom_call.1} parent=1 // pred_check
      _
    $region15: #{tpu_custom_call.1} parent=1 // pred_check_branch
      %48 = sbr.rel (0) target = $region17
    $region16: #{tpu_custom_call.1} parent=1 // pred_region
      %49 = dma.done [#allocation3], 1536
    $region17: #{tpu_custom_call.1} parent=1 // pred_fallthru
      _
    // Predicated region
    $region18: #{tpu_custom_call.1} parent=1 // pred_check
      _
    $region19: #{tpu_custom_call.1} parent=1 // pred_check_branch
      %51 = sbr.rel (0) target = $region21
    $region20: #{tpu_custom_call.1} parent=1 // pred_region
      %52 = dma.done [#allocation6], 8192
    $region21: #{tpu_custom_call.1} parent=1 // pred_fallthru
      _
    // Predicated region
    $region22: #{tpu_custom_call.1} parent=1 // pred_check
      _
    $region23: #{tpu_custom_call.1} parent=1 // pred_check_branch
      %54 = sbr.rel (0) target = $region25
    $region24: #{tpu_custom_call.1} parent=1 // pred_region
      %55 = dma.done [#allocation6], 1024
    $region25: #{tpu_custom_call.1} parent=1 // pred_fallthru
      _
    %v57 = vld [vmem:[#allocation2] sm:$0xff]
    %v58 = vld [vmem:[#allocation2 + $0x8] sm:$0xff]
    %v59 = vld [vmem:[#allocation2 + $0x10] sm:$0xff]
    %v60 = vld [vmem:[#allocation2 + $0x18] sm:$0xff]
    %v61 = vld [vmem:[#allocation2 + $0x20] sm:$0xff]
    %v62 = vld [vmem:[#allocation2 + $0x28] sm:$0xff]
    %v63 = vld [vmem:[#allocation2 + $0x30] sm:$0xff]
    %v64 = vld [vmem:[#allocation2 + $0x38] sm:$0xff]
    %v65 = vld [vmem:[#allocation2 + $0x40] sm:$0xff]
    %v66 = vld [vmem:[#allocation2 + $0x48] sm:$0xff]
    %v67 = vld [vmem:[#allocation2 + $0x50] sm:$0xff]
    %v68 = vld [vmem:[#allocation2 + $0x58] sm:$0xff]
    %v69 = vld [vmem:[#allocation5] sm:$0xff]
    %v70 = vld [vmem:[#allocation5 + $0x8] sm:$0xff]
    %v71 = vld [vmem:[#allocation5 + $0x10] sm:$0xff]
    %v72 = vld [vmem:[#allocation5 + $0x18] sm:$0xff]
    %v73 = vld [vmem:[#allocation5 + $0x20] sm:$0xff]
    %v74 = vld [vmem:[#allocation5 + $0x28] sm:$0xff]
    %v75 = vld [vmem:[#allocation5 + $0x30] sm:$0xff]
    %v76 = vld [vmem:[#allocation5 + $0x38] sm:$0xff]
    %v77 = vld [vmem:[#allocation5 + $0x40] sm:$0xff]
    %v78 = vld [vmem:[#allocation5 + $0x48] sm:$0xff]
    %v79 = vld [vmem:[#allocation5 + $0x50] sm:$0xff]
    %v80 = vld [vmem:[#allocation5 + $0x58] sm:$0xff]
    %v81 = vld [vmem:[#allocation5 + $0x60] sm:$0xff]
    %v82 = vld [vmem:[#allocation5 + $0x68] sm:$0xff]
    %v83 = vld [vmem:[#allocation5 + $0x70] sm:$0xff]
    %v84 = vld [vmem:[#allocation5 + $0x78] sm:$0xff]
    %v85 = vld [vmem:[#allocation5 + $0x80] sm:$0xff]
    %v86 = vld [vmem:[#allocation5 + $0x88] sm:$0xff]
    %v87 = vld [vmem:[#allocation5 + $0x90] sm:$0xff]
    %v88 = vld [vmem:[#allocation5 + $0x98] sm:$0xff]
    %v89 = vld [vmem:[#allocation5 + $0xa0] sm:$0xff]
    %v90 = vld [vmem:[#allocation5 + $0xa8] sm:$0xff]
    %v91 = vld [vmem:[#allocation5 + $0xb0] sm:$0xff]
    %v92 = vld [vmem:[#allocation5 + $0xb8] sm:$0xff]
    %v93 = vld [vmem:[#allocation5 + $0xc0] sm:$0xff]
    %v94 = vld [vmem:[#allocation5 + $0xc8] sm:$0xff]
    %v95 = vld [vmem:[#allocation5 + $0xd0] sm:$0xff]
    %v96 = vld [vmem:[#allocation5 + $0xd8] sm:$0xff]
    %v97 = vld [vmem:[#allocation5 + $0xe0] sm:$0xff]
    %v98 = vld [vmem:[#allocation5 + $0xe8] sm:$0xff]
    %v99 = vld [vmem:[#allocation5 + $0xf0] sm:$0xff]
    %v100 = vld [vmem:[#allocation5 + $0xf8] sm:$0xff]
    %v101 = vld [vmem:[#allocation5 + $0x100] sm:$0xff]
    %v102 = vld [vmem:[#allocation5 + $0x108] sm:$0xff]
    %v103 = vld [vmem:[#allocation5 + $0x110] sm:$0xff]
    %v104 = vld [vmem:[#allocation5 + $0x118] sm:$0xff]
    %v105 = vld [vmem:[#allocation5 + $0x120] sm:$0xff]
    %v106 = vld [vmem:[#allocation5 + $0x128] sm:$0xff]
    %v107 = vld [vmem:[#allocation5 + $0x130] sm:$0xff]
    %v108 = vld [vmem:[#allocation5 + $0x138] sm:$0xff]
    %v109 = vld [vmem:[#allocation5 + $0x140] sm:$0xff]
    %v110 = vld [vmem:[#allocation5 + $0x148] sm:$0xff]
    %v111 = vld [vmem:[#allocation5 + $0x150] sm:$0xff]
    %v112 = vld [vmem:[#allocation5 + $0x158] sm:$0xff]
    %v113 = vld [vmem:[#allocation5 + $0x160] sm:$0xff]
    %v114 = vld [vmem:[#allocation5 + $0x168] sm:$0xff]
    %v115 = vld [vmem:[#allocation5 + $0x170] sm:$0xff]
    %v116 = vld [vmem:[#allocation5 + $0x178] sm:$0xff]
    %v117 = vld [vmem:[#allocation5 + $0x180] sm:$0xff]
    %v118 = vld [vmem:[#allocation5 + $0x188] sm:$0xff]
    %v119 = vld [vmem:[#allocation5 + $0x190] sm:$0xff]
    %v120 = vld [vmem:[#allocation5 + $0x198] sm:$0xff]
    %v121 = vld [vmem:[#allocation5 + $0x1a0] sm:$0xff]
    %v122 = vld [vmem:[#allocation5 + $0x1a8] sm:$0xff]
    %v123 = vld [vmem:[#allocation5 + $0x1b0] sm:$0xff]
    %v124 = vld [vmem:[#allocation5 + $0x1b8] sm:$0xff]
    %v125 = vld [vmem:[#allocation5 + $0x1c0] sm:$0xff]
    %v126 = vld [vmem:[#allocation5 + $0x1c8] sm:$0xff]
    %v127 = vld [vmem:[#allocation5 + $0x1d0] sm:$0xff]
    %v128 = vld [vmem:[#allocation5 + $0x1d8] sm:$0xff]
    %v129 = vld [vmem:[#allocation5 + $0x1e0] sm:$0xff]
    %v130 = vld [vmem:[#allocation5 + $0x1e8] sm:$0xff]
    %v131 = vld [vmem:[#allocation5 + $0x1f0] sm:$0xff]
    %v132 = vld [vmem:[#allocation5 + $0x1f8] sm:$0xff]
    %v145 = vunpack.c.l.b16 %v57
    %v146 = vunpack.c.h.b16 %v57
    %v147 = vunpack.c.l.b16 %v58
    %v148 = vunpack.c.h.b16 %v58
    %v149 = vunpack.c.l.b16 %v59
    %v150 = vunpack.c.h.b16 %v59
    %v151 = vunpack.c.l.b16 %v60
    %v152 = vunpack.c.h.b16 %v60
    %v153 = vunpack.c.l.b16 %v61
    %v154 = vunpack.c.h.b16 %v61
    %v155 = vunpack.c.l.b16 %v62
    %v156 = vunpack.c.h.b16 %v62
    %v157 = vunpack.c.l.b16 %v63
    %v158 = vunpack.c.h.b16 %v63
    %v159 = vunpack.c.l.b16 %v64
    %v160 = vunpack.c.h.b16 %v64
    %v161 = vunpack.c.l.b16 %v65
    %v162 = vunpack.c.h.b16 %v65
    %v163 = vunpack.c.l.b16 %v66
    %v164 = vunpack.c.h.b16 %v66
    %v165 = vunpack.c.l.b16 %v67
    %v166 = vunpack.c.h.b16 %v67
    %v167 = vunpack.c.l.b16 %v68
    %v168 = vunpack.c.h.b16 %v68
    %v169 = vpack.c.b16 %v149, %v145
    %v170 = vpack.c.b16 %v150, %v146
    %v171 = vpack.c.b16 %v151, %v147
    %v172 = vpack.c.b16 %v152, %v148
    %v173 = vpack.c.b16 %v157, %v153
    %v174 = vpack.c.b16 %v158, %v154
    %v175 = vpack.c.b16 %v159, %v155
    %v176 = vpack.c.b16 %v160, %v156
    %v177 = vpack.c.b16 %v165, %v161
    %v178 = vpack.c.b16 %v166, %v162
    %v179 = vpack.c.b16 %v167, %v163
    %v180 = vpack.c.b16 %v168, %v164
    %v257 = vunpack.c.l.b16 %v69
    %v258 = vunpack.c.h.b16 %v69
    %v259 = vunpack.c.l.b16 %v70
    %v260 = vunpack.c.h.b16 %v70
    %v261 = vunpack.c.l.b16 %v71
    %v262 = vunpack.c.h.b16 %v71
    %v263 = vunpack.c.l.b16 %v72
    %v264 = vunpack.c.h.b16 %v72
    %v265 = vunpack.c.l.b16 %v73
    %v266 = vunpack.c.h.b16 %v73
    %v267 = vunpack.c.l.b16 %v74
    %v268 = vunpack.c.h.b16 %v74
    %v269 = vunpack.c.l.b16 %v75
    %v270 = vunpack.c.h.b16 %v75
    %v271 = vunpack.c.l.b16 %v76
    %v272 = vunpack.c.h.b16 %v76
    %v273 = vunpack.c.l.b16 %v77
    %v274 = vunpack.c.h.b16 %v77
    %v275 = vunpack.c.l.b16 %v78
    %v276 = vunpack.c.h.b16 %v78
    %v277 = vunpack.c.l.b16 %v79
    %v278 = vunpack.c.h.b16 %v79
    %v279 = vunpack.c.l.b16 %v80
    %v280 = vunpack.c.h.b16 %v80
    %v281 = vunpack.c.l.b16 %v81
    %v282 = vunpack.c.h.b16 %v81
    %v283 = vunpack.c.l.b16 %v82
    %v284 = vunpack.c.h.b16 %v82
    %v285 = vunpack.c.l.b16 %v83
    %v286 = vunpack.c.h.b16 %v83
    %v287 = vunpack.c.l.b16 %v84
    %v288 = vunpack.c.h.b16 %v84
    %v289 = vunpack.c.l.b16 %v85
    %v290 = vunpack.c.h.b16 %v85
    %v291 = vunpack.c.l.b16 %v86
    %v292 = vunpack.c.h.b16 %v86
    %v293 = vunpack.c.l.b16 %v87
    %v294 = vunpack.c.h.b16 %v87
    %v295 = vunpack.c.l.b16 %v88
    %v296 = vunpack.c.h.b16 %v88
    %v297 = vunpack.c.l.b16 %v89
    %v298 = vunpack.c.h.b16 %v89
    %v299 = vunpack.c.l.b16 %v90
    %v300 = vunpack.c.h.b16 %v90
    %v301 = vunpack.c.l.b16 %v91
    %v302 = vunpack.c.h.b16 %v91
    %v303 = vunpack.c.l.b16 %v92
    %v304 = vunpack.c.h.b16 %v92
    %v305 = vunpack.c.l.b16 %v93
    %v306 = vunpack.c.h.b16 %v93
    %v307 = vunpack.c.l.b16 %v94
    %v308 = vunpack.c.h.b16 %v94
    %v309 = vunpack.c.l.b16 %v95
    %v310 = vunpack.c.h.b16 %v95
    %v311 = vunpack.c.l.b16 %v96
    %v312 = vunpack.c.h.b16 %v96
    %v313 = vunpack.c.l.b16 %v97
    %v314 = vunpack.c.h.b16 %v97
    %v315 = vunpack.c.l.b16 %v98
    %v316 = vunpack.c.h.b16 %v98
    %v317 = vunpack.c.l.b16 %v99
    %v318 = vunpack.c.h.b16 %v99
    %v319 = vunpack.c.l.b16 %v100
    %v320 = vunpack.c.h.b16 %v100
    %v321 = vunpack.c.l.b16 %v101
    %v322 = vunpack.c.h.b16 %v101
    %v323 = vunpack.c.l.b16 %v102
    %v324 = vunpack.c.h.b16 %v102
    %v325 = vunpack.c.l.b16 %v103
    %v326 = vunpack.c.h.b16 %v103
    %v327 = vunpack.c.l.b16 %v104
    %v328 = vunpack.c.h.b16 %v104
    %v329 = vunpack.c.l.b16 %v105
    %v330 = vunpack.c.h.b16 %v105
    %v331 = vunpack.c.l.b16 %v106
    %v332 = vunpack.c.h.b16 %v106
    %v333 = vunpack.c.l.b16 %v107
    %v334 = vunpack.c.h.b16 %v107
    %v335 = vunpack.c.l.b16 %v108
    %v336 = vunpack.c.h.b16 %v108
    %v337 = vunpack.c.l.b16 %v109
    %v338 = vunpack.c.h.b16 %v109
    %v339 = vunpack.c.l.b16 %v110
    %v340 = vunpack.c.h.b16 %v110
    %v341 = vunpack.c.l.b16 %v111
    %v342 = vunpack.c.h.b16 %v111
    %v343 = vunpack.c.l.b16 %v112
    %v344 = vunpack.c.h.b16 %v112
    %v345 = vunpack.c.l.b16 %v113
    %v346 = vunpack.c.h.b16 %v113
    %v347 = vunpack.c.l.b16 %v114
    %v348 = vunpack.c.h.b16 %v114
    %v349 = vunpack.c.l.b16 %v115
    %v350 = vunpack.c.h.b16 %v115
    %v351 = vunpack.c.l.b16 %v116
    %v352 = vunpack.c.h.b16 %v116
    %v353 = vunpack.c.l.b16 %v117
    %v354 = vunpack.c.h.b16 %v117
    %v355 = vunpack.c.l.b16 %v118
    %v356 = vunpack.c.h.b16 %v118
    %v357 = vunpack.c.l.b16 %v119
    %v358 = vunpack.c.h.b16 %v119
    %v359 = vunpack.c.l.b16 %v120
    %v360 = vunpack.c.h.b16 %v120
    %v361 = vunpack.c.l.b16 %v121
    %v362 = vunpack.c.h.b16 %v121
    %v363 = vunpack.c.l.b16 %v122
    %v364 = vunpack.c.h.b16 %v122
    %v365 = vunpack.c.l.b16 %v123
    %v366 = vunpack.c.h.b16 %v123
    %v367 = vunpack.c.l.b16 %v124
    %v368 = vunpack.c.h.b16 %v124
    %v369 = vunpack.c.l.b16 %v125
    %v370 = vunpack.c.h.b16 %v125
    %v371 = vunpack.c.l.b16 %v126
    %v372 = vunpack.c.h.b16 %v126
    %v373 = vunpack.c.l.b16 %v127
    %v374 = vunpack.c.h.b16 %v127
    %v375 = vunpack.c.l.b16 %v128
    %v376 = vunpack.c.h.b16 %v128
    %v377 = vunpack.c.l.b16 %v129
    %v378 = vunpack.c.h.b16 %v129
    %v379 = vunpack.c.l.b16 %v130
    %v380 = vunpack.c.h.b16 %v130
    %v381 = vunpack.c.l.b16 %v131
    %v382 = vunpack.c.h.b16 %v131
    %v383 = vunpack.c.l.b16 %v132
    %v384 = vunpack.c.h.b16 %v132
    %v385 = vpack.c.b16 %v259, %v257
    %v386 = vpack.c.b16 %v260, %v258
    %v387 = vpack.c.b16 %v263, %v261
    %v388 = vpack.c.b16 %v264, %v262
    %v389 = vpack.c.b16 %v267, %v265
    %v390 = vpack.c.b16 %v268, %v266
    %v391 = vpack.c.b16 %v271, %v269
    %v392 = vpack.c.b16 %v272, %v270
    %v393 = vpack.c.b16 %v275, %v273
    %v394 = vpack.c.b16 %v276, %v274
    %v395 = vpack.c.b16 %v279, %v277
    %v396 = vpack.c.b16 %v280, %v278
    %v397 = vpack.c.b16 %v283, %v281
    %v398 = vpack.c.b16 %v284, %v282
    %v399 = vpack.c.b16 %v287, %v285
    %v400 = vpack.c.b16 %v288, %v286
    %v401 = vpack.c.b16 %v291, %v289
    %v402 = vpack.c.b16 %v292, %v290
    %v403 = vpack.c.b16 %v295, %v293
    %v404 = vpack.c.b16 %v296, %v294
    %v405 = vpack.c.b16 %v299, %v297
    %v406 = vpack.c.b16 %v300, %v298
    %v407 = vpack.c.b16 %v303, %v301
    %v408 = vpack.c.b16 %v304, %v302
    %v409 = vpack.c.b16 %v307, %v305
    %v410 = vpack.c.b16 %v308, %v306
    %v411 = vpack.c.b16 %v311, %v309
    %v412 = vpack.c.b16 %v312, %v310
    %v413 = vpack.c.b16 %v315, %v313
    %v414 = vpack.c.b16 %v316, %v314
    %v415 = vpack.c.b16 %v319, %v317
    %v416 = vpack.c.b16 %v320, %v318
    %v417 = vpack.c.b16 %v323, %v321
    %v418 = vpack.c.b16 %v324, %v322
    %v419 = vpack.c.b16 %v327, %v325
    %v420 = vpack.c.b16 %v328, %v326
    %v421 = vpack.c.b16 %v331, %v329
    %v422 = vpack.c.b16 %v332, %v330
    %v423 = vpack.c.b16 %v335, %v333
    %v424 = vpack.c.b16 %v336, %v334
    %v425 = vpack.c.b16 %v339, %v337
    %v426 = vpack.c.b16 %v340, %v338
    %v427 = vpack.c.b16 %v343, %v341
    %v428 = vpack.c.b16 %v344, %v342
    %v429 = vpack.c.b16 %v347, %v345
    %v430 = vpack.c.b16 %v348, %v346
    %v431 = vpack.c.b16 %v351, %v349
    %v432 = vpack.c.b16 %v352, %v350
    %v433 = vpack.c.b16 %v355, %v353
    %v434 = vpack.c.b16 %v356, %v354
    %v435 = vpack.c.b16 %v359, %v357
    %v436 = vpack.c.b16 %v360, %v358
    %v437 = vpack.c.b16 %v363, %v361
    %v438 = vpack.c.b16 %v364, %v362
    %v439 = vpack.c.b16 %v367, %v365
    %v440 = vpack.c.b16 %v368, %v366
    %v441 = vpack.c.b16 %v371, %v369
    %v442 = vpack.c.b16 %v372, %v370
    %v443 = vpack.c.b16 %v375, %v373
    %v444 = vpack.c.b16 %v376, %v374
    %v445 = vpack.c.b16 %v379, %v377
    %v446 = vpack.c.b16 %v380, %v378
    %v447 = vpack.c.b16 %v383, %v381
    %v448 = vpack.c.b16 %v384, %v382
    %513 = vmatprep.subr.bf16.mxu0 %v386
    %514 = vmatpush1.bf16.msra.mxu0 %v385
    %515 = vmatprep.subr.bf16.mxu0 %v388
    %516 = vmatpush1.bf16.msra.mxu0 %v387
    %517 = vmatprep.subr.bf16.mxu0 %v390
    %518 = vmatpush1.bf16.msra.mxu0 %v389
    %519 = vmatprep.subr.bf16.mxu0 %v392
    %520 = vmatpush1.bf16.msra.mxu0 %v391
    %521 = vmatprep.subr.bf16.mxu0 %v394
    %522 = vmatpush1.bf16.msra.mxu0 %v393
    %523 = vmatprep.subr.bf16.mxu0 %v396
    %524 = vmatpush1.bf16.msra.mxu0 %v395
    %525 = vmatprep.subr.bf16.mxu0 %v398
    %526 = vmatpush1.bf16.msra.mxu0 %v397
    %527 = vmatprep.subr.bf16.mxu0 %v400
    %528 = vmatpush1.bf16.msra.mxu0 %v399
    %529 = vmatprep.subr.bf16.mxu0 %v402
    %530 = vmatpush1.bf16.msra.mxu0 %v401
    %531 = vmatprep.subr.bf16.mxu0 %v404
    %532 = vmatpush1.bf16.msra.mxu0 %v403
    %533 = vmatprep.subr.bf16.mxu0 %v406
    %534 = vmatpush1.bf16.msra.mxu0 %v405
    %535 = vmatprep.subr.bf16.mxu0 %v408
    %536 = vmatpush1.bf16.msra.mxu0 %v407
    %537 = vmatprep.subr.bf16.mxu0 %v410
    %538 = vmatpush1.bf16.msra.mxu0 %v409
    %539 = vmatprep.subr.bf16.mxu0 %v412
    %540 = vmatpush1.bf16.msra.mxu0 %v411
    %541 = vmatprep.subr.bf16.mxu0 %v414
    %542 = vmatpush1.bf16.msra.mxu0 %v413
    %543 = vmatprep.subr.bf16.mxu0 %v416
    %544 = vmatpush1.bf16.msra.mxu0 %v415
    %545 = vmatprep.mubr.bf16.mxu0 %v170
    %546 = vmatmul.mubr.bf16.gmra.mrb[0].mxu0 %v169
    %v547 = vpop.f32.mrb[0].mxu0
    %v548 = vadd.f32 0.0, %v547
    %v549 = vpop.f32.mrb[0].mxu0
    %v550 = vadd.f32 0.0, %v549
    %v551 = vpop.f32.mrb[0].mxu0
    %v552 = vadd.f32 0.0, %v551
    %v553 = vpop.f32.mrb[0].mxu0
    %v554 = vadd.f32 0.0, %v553
    %555 = vmatprep.mubr.bf16.mxu0 %v174
    %556 = vmatmul.mubr.bf16.gmra.mrb[0].mxu0 %v173
    %v557 = vpop.f32.mrb[0].mxu0
    %v558 = vadd.f32 0.0, %v557
    %v559 = vpop.f32.mrb[0].mxu0
    %v560 = vadd.f32 0.0, %v559
    %v561 = vpop.f32.mrb[0].mxu0
    %v562 = vadd.f32 0.0, %v561
    %v563 = vpop.f32.mrb[0].mxu0
    %v564 = vadd.f32 0.0, %v563
    %565 = vmatprep.mubr.bf16.mxu0 %v178
    %566 = vmatmul.mubr.bf16.gmra.mrb[0].mxu0 %v177
    %v567 = vpop.f32.mrb[0].mxu0
    %v568 = vadd.f32 0.0, %v567
    %v569 = vpop.f32.mrb[0].mxu0
    %v570 = vadd.f32 0.0, %v569
    %v571 = vpop.f32.mrb[0].mxu0
    %v572 = vadd.f32 0.0, %v571
    %v573 = vpop.f32.mrb[0].mxu0
    %v574 = vadd.f32 0.0, %v573
    %575 = vdwg.mxu0
    %576 = vmatprep.subr.bf16.mxu0 %v418
    %577 = vmatpush1.bf16.msra.mxu0 %v417
    %578 = vmatprep.subr.bf16.mxu0 %v420
    %579 = vmatpush1.bf16.msra.mxu0 %v419
    %580 = vmatprep.subr.bf16.mxu0 %v422
    %581 = vmatpush1.bf16.msra.mxu0 %v421
    %582 = vmatprep.subr.bf16.mxu0 %v424
    %583 = vmatpush1.bf16.msra.mxu0 %v423
    %584 = vmatprep.subr.bf16.mxu0 %v426
    %585 = vmatpush1.bf16.msra.mxu0 %v425
    %586 = vmatprep.subr.bf16.mxu0 %v428
    %587 = vmatpush1.bf16.msra.mxu0 %v427
    %588 = vmatprep.subr.bf16.mxu0 %v430
    %589 = vmatpush1.bf16.msra.mxu0 %v429
    %590 = vmatprep.subr.bf16.mxu0 %v432
    %591 = vmatpush1.bf16.msra.mxu0 %v431
    %592 = vmatprep.subr.bf16.mxu0 %v434
    %593 = vmatpush1.bf16.msra.mxu0 %v433
    %594 = vmatprep.subr.bf16.mxu0 %v436
    %595 = vmatpush1.bf16.msra.mxu0 %v435
    %596 = vmatprep.subr.bf16.mxu0 %v438
    %597 = vmatpush1.bf16.msra.mxu0 %v437
    %598 = vmatprep.subr.bf16.mxu0 %v440
    %599 = vmatpush1.bf16.msra.mxu0 %v439
    %600 = vmatprep.subr.bf16.mxu0 %v442
    %601 = vmatpush1.bf16.msra.mxu0 %v441
    %602 = vmatprep.subr.bf16.mxu0 %v444
    %603 = vmatpush1.bf16.msra.mxu0 %v443
    %604 = vmatprep.subr.bf16.mxu0 %v446
    %605 = vmatpush1.bf16.msra.mxu0 %v445
    %606 = vmatprep.subr.bf16.mxu0 %v448
    %607 = vmatpush1.bf16.msra.mxu0 %v447
    %608 = vmatprep.mubr.bf16.mxu0 %v172
    %609 = vmatmul.mubr.bf16.gmra.mrb[0].mxu0 %v171
    %v610 = vpop.f32.mrb[0].mxu0
    %v611 = vadd.f32 %v548, %v610
    %v612 = vpop.f32.mrb[0].mxu0
    %v613 = vadd.f32 %v550, %v612
    %v614 = vpop.f32.mrb[0].mxu0
    %v615 = vadd.f32 %v552, %v614
    %v616 = vpop.f32.mrb[0].mxu0
    %v617 = vadd.f32 %v554, %v616
    %618 = vmatprep.mubr.bf16.mxu0 %v176
    %619 = vmatmul.mubr.bf16.gmra.mrb[0].mxu0 %v175
    %v620 = vpop.f32.mrb[0].mxu0
    %v621 = vadd.f32 %v558, %v620
    %v622 = vpop.f32.mrb[0].mxu0
    %v623 = vadd.f32 %v560, %v622
    %v624 = vpop.f32.mrb[0].mxu0
    %v625 = vadd.f32 %v562, %v624
    %v626 = vpop.f32.mrb[0].mxu0
    %v627 = vadd.f32 %v564, %v626
    %628 = vmatprep.mubr.bf16.mxu0 %v180
    %629 = vmatmul.mubr.bf16.gmra.mrb[0].mxu0 %v179
    %v630 = vpop.f32.mrb[0].mxu0
    %v631 = vadd.f32 %v568, %v630
    %v632 = vpop.f32.mrb[0].mxu0
    %v633 = vadd.f32 %v570, %v632
    %v634 = vpop.f32.mrb[0].mxu0
    %v635 = vadd.f32 %v572, %v634
    %v636 = vpop.f32.mrb[0].mxu0
    %v637 = vadd.f32 %v574, %v636
    %638 = vdwg.mxu0
    %v639 = vmul.f32 %v611, %v611
    %v640 = vmul.f32 %v615, %v615
    %v641 = vmul.f32 %v621, %v621
    %v642 = vmul.f32 %v625, %v625
    %v643 = vmul.f32 %v631, %v631
    %v644 = vmul.f32 %v635, %v635
    %v645 = vmul.f32 %v613, %v613
    %v646 = vmul.f32 %v617, %v617
    %v647 = vmul.f32 %v623, %v623
    %v648 = vmul.f32 %v627, %v627
    %v649 = vmul.f32 %v633, %v633
    %v650 = vmul.f32 %v637, %v637
    %v651 = vadd.f32 %v639, %v645
    %v652 = vadd.f32 %v640, %v646
    %v653 = vadd.f32 %v641, %v647
    %v654 = vadd.f32 %v642, %v648
    %v655 = vadd.f32 %v643, %v649
    %v656 = vadd.f32 %v644, %v650
    %v657 = vadd.f32 %v651, 1e-12
    %v658 = vadd.f32 %v652, 1e-12
    %v659 = vadd.f32 %v653, 1e-12
    %v660 = vadd.f32 %v654, 1e-12
    %v661 = vadd.f32 %v655, 1e-12
    %v662 = vadd.f32 %v656, 1e-12
    %v663 = vrsqrt.pop %v657
    %v664 = vmul.f32 %v657, %v663
    %vm665 = vcmp.eq.f32.partialorder %v657, inf
    %v666 = vsel %vm665, %v657, %v664
    %vm667 = vcmp.eq.f32.partialorder %v657, 0.0
    %v668 = vand.u32 %v657, 2147483648
    %v669 = vsel %vm667, %v668, %v666
    %v670 = vrsqrt.pop %v658
    %v671 = vmul.f32 %v658, %v670
    %vm672 = vcmp.eq.f32.partialorder %v658, inf
    %v673 = vsel %vm672, %v658, %v671
    %vm674 = vcmp.eq.f32.partialorder %v658, 0.0
    %v675 = vand.u32 %v658, 2147483648
    %v676 = vsel %vm674, %v675, %v673
    %v677 = vrsqrt.pop %v659
    %v678 = vmul.f32 %v659, %v677
    %vm679 = vcmp.eq.f32.partialorder %v659, inf
    %v680 = vsel %vm679, %v659, %v678
    %vm681 = vcmp.eq.f32.partialorder %v659, 0.0
    %v682 = vand.u32 %v659, 2147483648
    %v683 = vsel %vm681, %v682, %v680
    %v684 = vrsqrt.pop %v660
    %v685 = vmul.f32 %v660, %v684
    %vm686 = vcmp.eq.f32.partialorder %v660, inf
    %v687 = vsel %vm686, %v660, %v685
    %vm688 = vcmp.eq.f32.partialorder %v660, 0.0
    %v689 = vand.u32 %v660, 2147483648
    %v690 = vsel %vm688, %v689, %v687
    %v691 = vrsqrt.pop %v661
    %v692 = vmul.f32 %v661, %v691
    %vm693 = vcmp.eq.f32.partialorder %v661, inf
    %v694 = vsel %vm693, %v661, %v692
    %vm695 = vcmp.eq.f32.partialorder %v661, 0.0
    %v696 = vand.u32 %v661, 2147483648
    %v697 = vsel %vm695, %v696, %v694
    %v698 = vrsqrt.pop %v662
    %v699 = vmul.f32 %v662, %v698
    %vm700 = vcmp.eq.f32.partialorder %v662, inf
    %v701 = vsel %vm700, %v662, %v699
    %vm702 = vcmp.eq.f32.partialorder %v662, 0.0
    %v703 = vand.u32 %v662, 2147483648
    %v704 = vsel %vm702, %v703, %v701
    %v705 = vpack.c.bf16 %v676, %v669
    %v706 = vpack.c.bf16 %v690, %v683
    %v707 = vpack.c.bf16 %v704, %v697
    %v708 = vld [vmem:[#allocation7] sm:$0xf]
    %v709 = vld [vmem:[#allocation7 + $0x4] sm:$0xf]
    %v710 = vld [vmem:[#allocation7 + $0x8] sm:$0xf]
    %v711 = vld [vmem:[#allocation7 + $0xc] sm:$0xf]
    %v712 = vld [vmem:[#allocation7 + $0x10] sm:$0xf]
    %v713 = vld [vmem:[#allocation7 + $0x14] sm:$0xf]
    %v714 = vld [vmem:[#allocation7 + $0x18] sm:$0xf]
    %v715 = vld [vmem:[#allocation7 + $0x1c] sm:$0xf]
    %v716 = vld [vmem:[#allocation7 + $0x20] sm:$0xf]
    %v717 = vld [vmem:[#allocation7 + $0x24] sm:$0xf]
    %v718 = vld [vmem:[#allocation7 + $0x28] sm:$0xf]
    %v719 = vld [vmem:[#allocation7 + $0x2c] sm:$0xf]
    %v720 = vld [vmem:[#allocation7 + $0x30] sm:$0xf]
    %v721 = vld [vmem:[#allocation7 + $0x34] sm:$0xf]
    %v722 = vld [vmem:[#allocation7 + $0x38] sm:$0xf]
    %v723 = vld [vmem:[#allocation7 + $0x3c] sm:$0xf]
    %v740 = vunpack.c.l.b16 %v708
    %v741 = vunpack.c.l.b16 %v709
    %v742 = vunpack.c.l.b16 %v710
    %v743 = vunpack.c.l.b16 %v711
    %v744 = vunpack.c.l.b16 %v712
    %v745 = vunpack.c.l.b16 %v713
    %v746 = vunpack.c.l.b16 %v714
    %v747 = vunpack.c.l.b16 %v715
    %v748 = vunpack.c.l.b16 %v716
    %v749 = vunpack.c.l.b16 %v717
    %v750 = vunpack.c.l.b16 %v718
    %v751 = vunpack.c.l.b16 %v719
    %v752 = vunpack.c.l.b16 %v720
    %v753 = vunpack.c.l.b16 %v721
    %v754 = vunpack.c.l.b16 %v722
    %v755 = vunpack.c.l.b16 %v723
    %v756 = vpack.c.b16 %v741, %v740
    %v757 = vpack.c.b16 %v743, %v742
    %v758 = vpack.c.b16 %v745, %v744
    %v759 = vpack.c.b16 %v747, %v746
    %v760 = vpack.c.b16 %v749, %v748
    %v761 = vpack.c.b16 %v751, %v750
    %v762 = vpack.c.b16 %v753, %v752
    %v763 = vpack.c.b16 %v755, %v754
    %772 = vmatprep.subr.bf16.mxu0 0
    %773 = vmatpush1.bf16.msra.mxu0 %v756
    %774 = vmatprep.subr.bf16.mxu0 0
    %775 = vmatpush1.bf16.msra.mxu0 %v757
    %776 = vmatprep.subr.bf16.mxu0 0
    %777 = vmatpush1.bf16.msra.mxu0 %v758
    %778 = vmatprep.subr.bf16.mxu0 0
    %779 = vmatpush1.bf16.msra.mxu0 %v759
    %780 = vmatprep.subr.bf16.mxu0 0
    %781 = vmatpush1.bf16.msra.mxu0 %v760
    %782 = vmatprep.subr.bf16.mxu0 0
    %783 = vmatpush1.bf16.msra.mxu0 %v761
    %784 = vmatprep.subr.bf16.mxu0 0
    %785 = vmatpush1.bf16.msra.mxu0 %v762
    %786 = vmatprep.subr.bf16.mxu0 0
    %787 = vmatpush1.bf16.msra.mxu0 %v763
    %788 = vmatprep.subr.bf16.mxu0 0
    %789 = vmatpush1.bf16.msra.mxu0 0
    %790 = vmatprep.subr.bf16.mxu0 0
    %791 = vmatpush1.bf16.msra.mxu0 0
    %792 = vmatprep.subr.bf16.mxu0 0
    %793 = vmatpush1.bf16.msra.mxu0 0
    %794 = vmatprep.subr.bf16.mxu0 0
    %795 = vmatpush1.bf16.msra.mxu0 0
    %796 = vmatprep.subr.bf16.mxu0 0
    %797 = vmatpush1.bf16.msra.mxu0 0
    %798 = vmatprep.subr.bf16.mxu0 0
    %799 = vmatpush1.bf16.msra.mxu0 0
    %800 = vmatprep.subr.bf16.mxu0 0
    %801 = vmatpush1.bf16.msra.mxu0 0
    %802 = vmatprep.subr.bf16.mxu0 0
    %803 = vmatpush1.bf16.msra.mxu0 0
    %804 = vmatprep.mubr.bf16.mxu0 0
    %805 = vmatmul.mubr.bf16.gmra.mrb[0].mxu0 %v705
    %v806 = vpop.f32.mrb[0].mxu0
    %v807 = vadd.f32 0.0, %v806
    %v808 = vpop.f32.mrb[0].mxu0
    %v809 = vpop.f32.mrb[0].mxu0
    %v810 = vadd.f32 0.0, %v809
    %v811 = vpop.f32.mrb[0].mxu0
    %812 = vmatprep.mubr.bf16.mxu0 0
    %813 = vmatmul.mubr.bf16.gmra.mrb[0].mxu0 %v706
    %v814 = vpop.f32.mrb[0].mxu0
    %v815 = vadd.f32 0.0, %v814
    %v816 = vpop.f32.mrb[0].mxu0
    %v817 = vpop.f32.mrb[0].mxu0
    %v818 = vadd.f32 0.0, %v817
    %v819 = vpop.f32.mrb[0].mxu0
    %820 = vmatprep.mubr.bf16.mxu0 0
    %821 = vmatmul.mubr.bf16.gmra.mrb[0].mxu0 %v707
    %v822 = vpop.f32.mrb[0].mxu0
    %v823 = vadd.f32 0.0, %v822
    %v824 = vpop.f32.mrb[0].mxu0
    %v825 = vpop.f32.mrb[0].mxu0
    %v826 = vadd.f32 0.0, %v825
    %v827 = vpop.f32.mrb[0].mxu0
    %828 = vdwg.mxu0
    %829 = vst [vmem:[#allocation8] sm:$0xff] %v807
    %830 = vst [vmem:[#allocation8 + $0x8] sm:$0xff] %v810
    %831 = vst [vmem:[#allocation8 + $0x10] sm:$0xff] %v815
    %832 = vst [vmem:[#allocation8 + $0x18] sm:$0xff] %v818
    %833 = vst [vmem:[#allocation8 + $0x20] sm:$0xff] %v823
    %834 = vst [vmem:[#allocation8 + $0x28] sm:$0xff] %v826
    // Predicated region
    $region26: #{tpu_custom_call.1} parent=1 // pred_check
      _
    $region27: #{tpu_custom_call.1} parent=1 // pred_check_branch
      %836 = sbr.rel (0) target = $region29
    $region28: #{tpu_custom_call.1} parent=1 // pred_region
      %s838 = ssub.s32 768, 768
      %839 = vsyncadd [#allocation4], %s838
      %s840 = sshll.u32 [#allocation8], 4
      %s841 = int_to_ptr.vmem [resolvable:$true] %s840
      %846 = dma.vmem_to_hbm [thread:$0]  %s841, 768, %s3, [#allocation4], 128, 128, 8
    $region29: #{tpu_custom_call.1} parent=1 // pred_fallthru
      _
    // Predicated region
    $region30: #{tpu_custom_call.1} parent=1 // pred_check
      _
    $region31: #{tpu_custom_call.1} parent=1 // pred_check_branch
      %848 = sbr.rel (0) target = $region33
    $region32: #{tpu_custom_call.1} parent=1 // pred_region
      %849 = dma.done [#allocation4], 768
    $region33: #{tpu_custom_call.1} parent=1 // pred_fallthru
      _
    %850 = vsyncpa [#allocation3], 1
    %851 = vsyncpa [#allocation6], 1
    %852 = vsyncpa [#allocation4], 1

</llo_original>
